<compile_context>
chip_gen: v7x
topology: tpu7x:2x2x1
jax: 0.10.0
libtpu: 0.0.40
codegen_flags: <defaults>
</compile_context>

<pallas_src>
import jax
import jax.numpy as jnp
from jax.experimental import pallas as pl
from jax.experimental.pallas import tpu as pltpu


def mlp_kernel(x_ref, w1_ref, b1_ref, w2_ref, b2_ref, o_ref):
    """One batch tile: (tb, d_in) x (d_in, d_hid) -> relu -> x (d_hid, d_out)."""
    mxu_dtype = w1_ref.dtype

    x = x_ref[...]
    if x.dtype != mxu_dtype:            # trace-time branch (static dtypes)
        x = x.astype(mxu_dtype)

    # First linear on the MXU, f32 accumulation; bias + ReLU epilogue in f32.
    h = jnp.dot(x, w1_ref[...], preferred_element_type=jnp.float32)
    h = h + b1_ref[...]                 # b1 is (1, d_hid) f32 -> broadcasts
    h = jnp.maximum(h, 0.0)             # clamp(min=0)

    # Feed the second matmul in the MXU dtype (bf16) but keep f32 accumulate.
    h_mxu = h if w2_ref.dtype == jnp.float32 else h.astype(w2_ref.dtype)
    y = jnp.dot(h_mxu, w2_ref[...], preferred_element_type=jnp.float32)
    y = y + b2_ref[...]                 # b2 is (1, d_out) f32
    o_ref[...] = y.astype(o_ref.dtype)


def _round_up(n, m):
    return ((n + m - 1) // m) * m


def prepare_testnet_params(w1, b1, w2, b2, *, mxu_dtype=jnp.bfloat16):
    """One-time parameter prep (do NOT call per forward).

    w1: [D_in, D_hid], w2: [D_hid, D_out]  (transpose of torch's [out, in])
    b1: [D_hid], b2: [D_out]

    Pads feature dims to lane-dense multiples of 128 (zero-padding is
    semantics-preserving: padded rows/cols/biases are zero, relu(0)=0) and
    casts the weight matrices to the MXU feed dtype. Biases stay f32 for the
    f32 epilogue.
    """
    D_in, D_hid = w1.shape
    D_out = w2.shape[1]
    d_in_p = _round_up(D_in, 128)
    d_hid_p = _round_up(D_hid, 128)
    d_out_p = _round_up(D_out, 128)

    w1p = jnp.pad(w1, ((0, d_in_p - D_in), (0, d_hid_p - D_hid))).astype(mxu_dtype)
    w2p = jnp.pad(w2, ((0, d_hid_p - D_hid), (0, d_out_p - D_out))).astype(mxu_dtype)
    b1p = jnp.pad(b1.reshape(1, -1), ((0, 0), (0, d_hid_p - D_hid))).astype(jnp.float32)
    b2p = jnp.pad(b2.reshape(1, -1), ((0, 0), (0, d_out_p - D_out))).astype(jnp.float32)

    return {
        "w1": w1p, "b1": b1p, "w2": w2p, "b2": b2p,
        "d_in": D_in, "d_out": D_out,
    }


def _choose_batch_tile(b_p, d_in_p, d_out_p, itemsize, block_batch,
                       target_tile_bytes=4 << 20, min_grid_steps=4):
    """Pick a batch tile whose x+y traffic per step is a few MiB, but keep
    >= min_grid_steps grid steps when the batch allows (>= 2 per TC on v7x)."""
    if block_batch is not None:
        return min(_round_up(block_batch, 8), b_p)   # always a multiple of 8
    bytes_per_row = (d_in_p + d_out_p) * itemsize
    tb = _round_up(max(8, target_tile_bytes // bytes_per_row), 8)
    tb = min(tb, b_p)
    while tb > 256 and pl.cdiv(b_p, tb) < min_grid_steps:
        tb = max(256, _round_up(tb // 2, 8))
    return tb


def _nbytes(a):
    return a.size * a.dtype.itemsize


def testnet_forward(x, params, *, block_batch=None):
    """TestNet forward. x: [B, D_in] (f32). params from prepare_testnet_params."""
    w1, b1, w2, b2 = params["w1"], params["b1"], params["w2"], params["b2"]
    D_in, D_out = params["d_in"], params["d_out"]
    d_in_p, d_hid_p = w1.shape
    d_out_p = w2.shape[1]

    B = x.shape[0]
    assert x.shape[1] == D_in, "x feature dim does not match the parameters"

    # Minimal batch padding (sublane alignment only) + lane-dense feature pad.
    b_p = _round_up(B, 8)
    if (b_p, d_in_p) != x.shape:
        x = jnp.pad(x, ((0, b_p - B), (0, d_in_p - D_in)))

    tb = _choose_batch_tile(b_p, d_in_p, d_out_p, x.dtype.itemsize, block_batch)
    grid = (pl.cdiv(b_p, tb),)   # partial last block handled by Pallas (writes clipped)

    # --- explicit VMEM budget (resident weights are single-buffered) -------------
    resident = _nbytes(w1) + _nbytes(b1) + _nbytes(w2) + _nbytes(b2)
    x_tile = tb * d_in_p * x.dtype.itemsize
    y_tile = tb * d_out_p * jnp.dtype(x.dtype).itemsize
    vmem_needed = resident + 2 * (x_tile + y_tile) + (4 << 20)   # +headroom for h etc.
    # Explicit limit (v5e's scoped default is only 16 MiB); cap at v7x's 64 MiB.
    vmem_limit = int(min(max(vmem_needed, 32 << 20), 64 << 20))
    # TODO(synk): if vmem_needed exceeds v7x's 64 MiB (very large hidden dims),
    # add a reduction grid axis over d_hid ("arbitrary" semantics + f32 acc
    # scratch) instead of keeping both weight matrices fully resident.

    flops = 2 * b_p * (d_in_p * d_hid_p + d_hid_p * d_out_p)
    bytes_accessed = (b_p * d_in_p * x.dtype.itemsize + resident
                      + b_p * d_out_p * jnp.dtype(x.dtype).itemsize)

    out = pl.pallas_call(
        mlp_kernel,
        out_shape=jax.ShapeDtypeStruct((b_p, d_out_p), x.dtype),
        grid=grid,
        in_specs=[
            # x: tiled over batch, double-buffered by the pipeline.
            pl.BlockSpec((tb, d_in_p), lambda i: (i, 0)),
            # Resident operands: constant index_map, single buffer (no re-fetch).
            pl.BlockSpec((d_in_p, d_hid_p), lambda i: (0, 0),
                         pipeline_mode=pl.Buffered(1)),
            pl.BlockSpec((1, d_hid_p), lambda i: (0, 0),
                         pipeline_mode=pl.Buffered(1)),
            pl.BlockSpec((d_hid_p, d_out_p), lambda i: (0, 0),
                         pipeline_mode=pl.Buffered(1)),
            pl.BlockSpec((1, d_out_p), lambda i: (0, 0),
                         pipeline_mode=pl.Buffered(1)),
        ],
        out_specs=pl.BlockSpec((tb, d_out_p), lambda i: (i, 0)),
        compiler_params=pltpu.CompilerParams(
            dimension_semantics=("parallel",),   # batch tiles independent -> megacore
            vmem_limit_bytes=vmem_limit,
        ),
        cost_estimate=pl.CostEstimate(
            flops=flops, transcendentals=0, bytes_accessed=bytes_accessed),
    )(x, w1, b1, w2, b2)

    return out[:B, :D_out]


if __name__ == "__main__":
    # Small shapes consistent with the module (TestNet is a tiny 2-layer MLP);
    # non-multiples of 128 exercise the padding path.
    batch, input_dim, hidden_dim, output_dim = 64, 12, 24, 8

    key = jax.random.PRNGKey(0)
    kx, kw1, kb1, kw2, kb2 = jax.random.split(key, 5)

    x = jax.random.normal(kx, (batch, input_dim), dtype=jnp.float32)

    # Deterministic synthetic parameters, stored as [in, out] (torch's W^T).
    w1 = jax.random.normal(kw1, (input_dim, hidden_dim), dtype=jnp.float32) * 0.1
    b1 = jax.random.normal(kb1, (hidden_dim,), dtype=jnp.float32) * 0.1
    w2 = jax.random.normal(kw2, (hidden_dim, output_dim), dtype=jnp.float32) * 0.1
    b2 = jax.random.normal(kb2, (output_dim,), dtype=jnp.float32) * 0.1

    # One-time prep (pad + bf16 cast) outside the per-forward path.
    params = prepare_testnet_params(w1, b1, w2, b2, mxu_dtype=jnp.bfloat16)

    out = testnet_forward(x, params)
    jax.block_until_ready(out)

    # Plain-JAX f32 reference; bf16 MXU feed -> relaxed tolerance.
    ref = jnp.maximum(x @ w1 + b1[None, :], 0.0) @ w2 + b2[None, :]
    assert out.shape == (batch, output_dim)
    assert jnp.allclose(out, ref, atol=2e-2, rtol=2e-2), "mismatch vs reference"

    print("KERNEL_OK")
</pallas_src>

<mosaic_0001>
module attributes {stable_mosaic.version = 11 : i64} {
  func.func @mlp_kernel(%arg0: i32, %arg1: memref<64x128xf32, #tpu.memory_space<vmem>>, %arg2: memref<128x128xbf16, #tpu.memory_space<vmem>>, %arg3: memref<1x128xf32, #tpu.memory_space<vmem>>, %arg4: memref<128x128xbf16, #tpu.memory_space<vmem>>, %arg5: memref<1x128xf32, #tpu.memory_space<vmem>>, %arg6: memref<64x128xf32, #tpu.memory_space<vmem>>) attributes {dimension_semantics = [#tpu.dimension_semantics<parallel>], iteration_bounds = array<i64: 1>, scalar_prefetch = 0 : i64, scratch_operands = 0 : i64, tpu.core_type = #tpu.core_type<tc>, window_params = [{transform_indices = @transform_0, window_bounds = array<i64: 64, 128>}, {pipeline_mode = #tpu.pipeline_mode<synchronous>, transform_indices = @transform_1, window_bounds = array<i64: 128, 128>}, {pipeline_mode = #tpu.pipeline_mode<synchronous>, transform_indices = @transform_2, window_bounds = array<i64: 1, 128>}, {pipeline_mode = #tpu.pipeline_mode<synchronous>, transform_indices = @transform_3, window_bounds = array<i64: 128, 128>}, {pipeline_mode = #tpu.pipeline_mode<synchronous>, transform_indices = @transform_4, window_bounds = array<i64: 1, 128>}, {transform_indices = @transform_5, window_bounds = array<i64: 64, 128>}]} {
    %c0 = arith.constant 0 : index
    %c0_0 = arith.constant 0 : index
    %0 = vector.load %arg1[%c0, %c0_0] : memref<64x128xf32, #tpu.memory_space<vmem>>, vector<64x128xf32>
    %1 = arith.truncf %0 : vector<64x128xf32> to vector<64x128xbf16>
    %c0_1 = arith.constant 0 : index
    %c0_2 = arith.constant 0 : index
    %2 = vector.load %arg2[%c0_1, %c0_2] : memref<128x128xbf16, #tpu.memory_space<vmem>>, vector<128x128xbf16>
    %cst = arith.constant dense<0.000000e+00> : vector<64x128xf32>
    %3 = tpu.matmul %1, %2, %cst {dimension_numbers = #tpu.dot_dimension_numbers<[1], [0], [0], [1], [0, 0, 1, 1], [], []>} : vector<64x128xbf16>, vector<128x128xbf16>, vector<64x128xf32> -> vector<64x128xf32>
    %c0_3 = arith.constant 0 : index
    %c0_4 = arith.constant 0 : index
    %4 = vector.load %arg3[%c0_3, %c0_4] : memref<1x128xf32, #tpu.memory_space<vmem>>, vector<1x128xf32>
    %5 = vector.broadcast %4 : vector<1x128xf32> to vector<64x128xf32>
    %6 = arith.addf %3, %5 : vector<64x128xf32>
    %cst_5 = arith.constant 0.000000e+00 : f32
    %7 = vector.broadcast %cst_5 : f32 to vector<64x128xf32>
    %8 = arith.maximumf %6, %7 : vector<64x128xf32>
    %9 = arith.truncf %8 : vector<64x128xf32> to vector<64x128xbf16>
    %c0_6 = arith.constant 0 : index
    %c0_7 = arith.constant 0 : index
    %10 = vector.load %arg4[%c0_6, %c0_7] : memref<128x128xbf16, #tpu.memory_space<vmem>>, vector<128x128xbf16>
    %cst_8 = arith.constant dense<0.000000e+00> : vector<64x128xf32>
    %11 = tpu.matmul %9, %10, %cst_8 {dimension_numbers = #tpu.dot_dimension_numbers<[1], [0], [0], [1], [0, 0, 1, 1], [], []>} : vector<64x128xbf16>, vector<128x128xbf16>, vector<64x128xf32> -> vector<64x128xf32>
    %c0_9 = arith.constant 0 : index
    %c0_10 = arith.constant 0 : index
    %12 = vector.load %arg5[%c0_9, %c0_10] : memref<1x128xf32, #tpu.memory_space<vmem>>, vector<1x128xf32>
    %13 = vector.broadcast %12 : vector<1x128xf32> to vector<64x128xf32>
    %14 = arith.addf %11, %13 : vector<64x128xf32>
    %c0_11 = arith.constant 0 : index
    %c0_12 = arith.constant 0 : index
    %15 = vector.load %arg6[%c0_11, %c0_12] : memref<64x128xf32, #tpu.memory_space<vmem>>, vector<64x128xf32>
    tpu.vector_store %arg6[%c0_11, %c0_12], %14 {strides = array<i32>} : memref<64x128xf32, #tpu.memory_space<vmem>>, vector<64x128xf32>,
    return
  }
  func.func @transform_0(%arg0: i32) -> (i32, i32) {
    %c0_i32 = arith.constant 0 : i32
    %c0_i32_0 = arith.constant 0 : i32
    return %arg0, %c0_i32 : i32, i32
  }
  func.func @transform_1(%arg0: i32) -> (i32, i32) {
    %c0_i32 = arith.constant 0 : i32
    %c0_i32_0 = arith.constant 0 : i32
    %c0_i32_1 = arith.constant 0 : i32
    return %c0_i32, %c0_i32_0 : i32, i32
  }
  func.func @transform_2(%arg0: i32) -> (i32, i32) {
    %c0_i32 = arith.constant 0 : i32
    %c0_i32_0 = arith.constant 0 : i32
    %c0_i32_1 = arith.constant 0 : i32
    return %c0_i32, %c0_i32_0 : i32, i32
  }
  func.func @transform_3(%arg0: i32) -> (i32, i32) {
    %c0_i32 = arith.constant 0 : i32
    %c0_i32_0 = arith.constant 0 : i32
    %c0_i32_1 = arith.constant 0 : i32
    return %c0_i32, %c0_i32_0 : i32, i32
  }
  func.func @transform_4(%arg0: i32) -> (i32, i32) {
    %c0_i32 = arith.constant 0 : i32
    %c0_i32_0 = arith.constant 0 : i32
    %c0_i32_1 = arith.constant 0 : i32
    return %c0_i32, %c0_i32_0 : i32, i32
  }
  func.func @transform_5(%arg0: i32) -> (i32, i32) {
    %c0_i32 = arith.constant 0 : i32
    %c0_i32_0 = arith.constant 0 : i32
    return %arg0, %c0_i32 : i32, i32
  }
}

</mosaic_0001>

<llo_original>
// kernel: tpu_custom_call.1
$region0: #{tpu_custom_call.1}
  #allocation0 [shape = 'u32[]', space=smem, size = 0x4, offset = 0x4, fixed_abs, tag = 'smem constant byte address 0x4 - core index']
  #allocation1 [shape = 'u32[144,128]{1,0:T(1,128)}', space=vmem, size = 0x12000, scoped, tag = 'internal scratch']
  %s0 = inlined_call_operand.hbm [shape: f32[64,128], index: 0, kind: input, shape index: {}]
  %s1 = inlined_call_operand.hbm [shape: bf16[128,128], index: 1, kind: input, shape index: {}]
  %s2 = inlined_call_operand.vmem [shape: f32[1,128], index: 2, kind: input, shape index: {}]
  %s3 = inlined_call_operand.hbm [shape: bf16[128,128], index: 3, kind: input, shape index: {}]
  %s4 = inlined_call_operand.vmem [shape: f32[1,128], index: 4, kind: input, shape index: {}]
  %s5 = inlined_call_operand.hbm [shape: f32[64,128], index: 5, kind: output, shape index: {}]
  %s6 = sld [smem:[#allocation0]]
  $region42: #{tpu_custom_call.1} parent=0
    _
  %s8 = ssub.s32 1, %s6
  %s9 = scalar_select 0, %s8, %s6
  $region1: #{tpu_custom_call.1} parent=0
    #allocation2 [shape = 'u8[32768]{0}', space=vmem, size = 0x8000, scoped, tag = 'input window, operand 0, single buffered']
    #allocation3 [shape = 's32[1]{0}', space=sflag, size = 0x4, scoped, tag = 'scoped memory for tpu_custom_call.1']
    #allocation4 [shape = 's32[1]{0}', space=sflag, size = 0x4, scoped, tag = 'scoped memory for tpu_custom_call.1']
    #allocation5 [shape = 'u8[32768]{0}', space=vmem, size = 0x8000, scoped, tag = 'input window, operand 1, single buffered']
    #allocation6 [shape = 's32[1]{0}', space=sflag, size = 0x4, scoped, tag = 'scoped memory for tpu_custom_call.1']
    #allocation7 [shape = 'u8[32768]{0}', space=vmem, size = 0x8000, scoped, tag = 'input window, operand 3, single buffered']
    #allocation8 [shape = 'u8[32768]{0}', space=vmem, size = 0x8000, scoped, tag = 'output window, operand 0, single buffered']
    %10 = vsyncpa [#allocation3], 0
    %11 = vsyncpa [#allocation6], 0
    %12 = vsyncpa [#allocation4], 0
    // Predicated region
    $region2: #{tpu_custom_call.1} parent=1 // pred_check
      _
    $region3: #{tpu_custom_call.1} parent=1 // pred_check_branch
      %14 = sbr.rel (0) target = $region5
    $region4: #{tpu_custom_call.1} parent=1 // pred_region
      %s16 = ssub.s32 1024, 1024
      %17 = vsyncadd [#allocation3], %s16
      %s18 = sshll.u32 [#allocation2], 4
      %s19 = int_to_ptr.vmem [resolvable:$true] %s18
      %24 = dma.hbm_to_vmem [thread:$0]  %s0, 1024, %s19, [#allocation3], 128, 128, 8
    $region5: #{tpu_custom_call.1} parent=1 // pred_fallthru
      _
    // Predicated region
    $region6: #{tpu_custom_call.1} parent=1 // pred_check
      _
    $region7: #{tpu_custom_call.1} parent=1 // pred_check_branch
      %26 = sbr.rel (0) target = $region9
    $region8: #{tpu_custom_call.1} parent=1 // pred_region
      %s28 = ssub.s32 1024, 1024
      %29 = vsyncadd [#allocation6], %s28
      %s30 = sshll.u32 [#allocation5], 4
      %s31 = int_to_ptr.vmem [resolvable:$true] %s30
      %36 = dma.hbm_to_vmem [thread:$0]  %s1, 1024, %s31, [#allocation6], 64, 64, 4
    $region9: #{tpu_custom_call.1} parent=1 // pred_fallthru
      _
    // Predicated region
    $region10: #{tpu_custom_call.1} parent=1 // pred_check
      _
    $region11: #{tpu_custom_call.1} parent=1 // pred_check_branch
      %38 = sbr.rel (0) target = $region13
    $region12: #{tpu_custom_call.1} parent=1 // pred_region
      _
    $region13: #{tpu_custom_call.1} parent=1 // pred_fallthru
      _
    // Predicated region
    $region14: #{tpu_custom_call.1} parent=1 // pred_check
      _
    $region15: #{tpu_custom_call.1} parent=1 // pred_check_branch
      %40 = sbr.rel (0) target = $region17
    $region16: #{tpu_custom_call.1} parent=1 // pred_region
      %s42 = ssub.s32 1024, 1024
      %43 = vsyncadd [#allocation6], %s42
      %s44 = sshll.u32 [#allocation7], 4
      %s45 = int_to_ptr.vmem [resolvable:$true] %s44
      %50 = dma.hbm_to_vmem [thread:$0]  %s3, 1024, %s45, [#allocation6], 64, 64, 4
    $region17: #{tpu_custom_call.1} parent=1 // pred_fallthru
      _
    // Predicated region
    $region18: #{tpu_custom_call.1} parent=1 // pred_check
      _
    $region19: #{tpu_custom_call.1} parent=1 // pred_check_branch
      %52 = sbr.rel (0) target = $region21
    $region20: #{tpu_custom_call.1} parent=1 // pred_region
      _
    $region21: #{tpu_custom_call.1} parent=1 // pred_fallthru
      _
    // Predicated region
    $region22: #{tpu_custom_call.1} parent=1 // pred_check
      _
    $region23: #{tpu_custom_call.1} parent=1 // pred_check_branch
      %54 = sbr.rel (0) target = $region25
    $region24: #{tpu_custom_call.1} parent=1 // pred_region
      %55 = dma.done [#allocation3], 1024
    $region25: #{tpu_custom_call.1} parent=1 // pred_fallthru
      _
    // Predicated region
    $region26: #{tpu_custom_call.1} parent=1 // pred_check
      _
    $region27: #{tpu_custom_call.1} parent=1 // pred_check_branch
      %57 = sbr.rel (0) target = $region29
    $region28: #{tpu_custom_call.1} parent=1 // pred_region
      %58 = dma.done [#allocation6], 1024
    $region29: #{tpu_custom_call.1} parent=1 // pred_fallthru
      _
    // Predicated region
    $region30: #{tpu_custom_call.1} parent=1 // pred_check
      _
    $region31: #{tpu_custom_call.1} parent=1 // pred_check_branch
      %60 = sbr.rel (0) target = $region33
    $region32: #{tpu_custom_call.1} parent=1 // pred_region
      %61 = dma.done [#allocation6], 1024
    $region33: #{tpu_custom_call.1} parent=1 // pred_fallthru
      _
    %v63 = vld [vmem:[#allocation2] sm:$0xff]
    %v64 = vld [vmem:[#allocation2 + $0x8] sm:$0xff]
    %v65 = vld [vmem:[#allocation2 + $0x10] sm:$0xff]
    %v66 = vld [vmem:[#allocation2 + $0x18] sm:$0xff]
    %v67 = vld [vmem:[#allocation2 + $0x20] sm:$0xff]
    %v68 = vld [vmem:[#allocation2 + $0x28] sm:$0xff]
    %v69 = vld [vmem:[#allocation2 + $0x30] sm:$0xff]
    %v70 = vld [vmem:[#allocation2 + $0x38] sm:$0xff]
    %v71 = vpack.c.bf16 %v64, %v63
    %v72 = vpack.c.bf16 %v66, %v65
    %v73 = vpack.c.bf16 %v68, %v67
    %v74 = vpack.c.bf16 %v70, %v69
    %v75 = vld [vmem:[#allocation5] sm:$0xf]
    %v76 = vld [vmem:[#allocation5 + $0x4] sm:$0xf]
    %v77 = vld [vmem:[#allocation5 + $0x8] sm:$0xf]
    %v78 = vld [vmem:[#allocation5 + $0xc] sm:$0xf]
    %v79 = vld [vmem:[#allocation5 + $0x10] sm:$0xf]
    %v80 = vld [vmem:[#allocation5 + $0x14] sm:$0xf]
    %v81 = vld [vmem:[#allocation5 + $0x18] sm:$0xf]
    %v82 = vld [vmem:[#allocation5 + $0x1c] sm:$0xf]
    %v83 = vld [vmem:[#allocation5 + $0x20] sm:$0xf]
    %v84 = vld [vmem:[#allocation5 + $0x24] sm:$0xf]
    %v85 = vld [vmem:[#allocation5 + $0x28] sm:$0xf]
    %v86 = vld [vmem:[#allocation5 + $0x2c] sm:$0xf]
    %v87 = vld [vmem:[#allocation5 + $0x30] sm:$0xf]
    %v88 = vld [vmem:[#allocation5 + $0x34] sm:$0xf]
    %v89 = vld [vmem:[#allocation5 + $0x38] sm:$0xf]
    %v90 = vld [vmem:[#allocation5 + $0x3c] sm:$0xf]
    %v91 = vld [vmem:[%s2] sm:$0x1]
    %v93 = vlaneseq
    %v94 = vshrl.u32 %v93, 7
    %v95 = vsub.s32 0, %v94
    %v96 = vrot.slane %v91, %v95
    %v114 = vunpack.c.l.b16 %v75
    %v115 = vunpack.c.l.b16 %v76
    %v116 = vunpack.c.l.b16 %v77
    %v117 = vunpack.c.l.b16 %v78
    %v118 = vunpack.c.l.b16 %v79
    %v119 = vunpack.c.l.b16 %v80
    %v120 = vunpack.c.l.b16 %v81
    %v121 = vunpack.c.l.b16 %v82
    %v122 = vunpack.c.l.b16 %v83
    %v123 = vunpack.c.l.b16 %v84
    %v124 = vunpack.c.l.b16 %v85
    %v125 = vunpack.c.l.b16 %v86
    %v126 = vunpack.c.l.b16 %v87
    %v127 = vunpack.c.l.b16 %v88
    %v128 = vunpack.c.l.b16 %v89
    %v129 = vunpack.c.l.b16 %v90
    %v130 = vpack.c.b16 %v115, %v114
    %v131 = vpack.c.b16 %v117, %v116
    %v132 = vpack.c.b16 %v119, %v118
    %v133 = vpack.c.b16 %v121, %v120
    %v134 = vpack.c.b16 %v123, %v122
    %v135 = vpack.c.b16 %v125, %v124
    %v136 = vpack.c.b16 %v127, %v126
    %v137 = vpack.c.b16 %v129, %v128
    %146 = vmatprep.subr.bf16.mxu0 0
    %147 = vmatpush1.bf16.msra.mxu0 %v130
    %148 = vmatprep.subr.bf16.mxu0 0
    %149 = vmatpush1.bf16.msra.mxu0 %v131
    %150 = vmatprep.subr.bf16.mxu0 0
    %151 = vmatpush1.bf16.msra.mxu0 %v132
    %152 = vmatprep.subr.bf16.mxu0 0
    %153 = vmatpush1.bf16.msra.mxu0 %v133
    %154 = vmatprep.subr.bf16.mxu0 0
    %155 = vmatpush1.bf16.msra.mxu0 %v134
    %156 = vmatprep.subr.bf16.mxu0 0
    %157 = vmatpush1.bf16.msra.mxu0 %v135
    %158 = vmatprep.subr.bf16.mxu0 0
    %159 = vmatpush1.bf16.msra.mxu0 %v136
    %160 = vmatprep.subr.bf16.mxu0 0
    %161 = vmatpush1.bf16.msra.mxu0 %v137
    %162 = vmatprep.subr.bf16.mxu0 0
    %163 = vmatpush1.bf16.msra.mxu0 0
    %164 = vmatprep.subr.bf16.mxu0 0
    %165 = vmatpush1.bf16.msra.mxu0 0
    %166 = vmatprep.subr.bf16.mxu0 0
    %167 = vmatpush1.bf16.msra.mxu0 0
    %168 = vmatprep.subr.bf16.mxu0 0
    %169 = vmatpush1.bf16.msra.mxu0 0
    %170 = vmatprep.subr.bf16.mxu0 0
    %171 = vmatpush1.bf16.msra.mxu0 0
    %172 = vmatprep.subr.bf16.mxu0 0
    %173 = vmatpush1.bf16.msra.mxu0 0
    %174 = vmatprep.subr.bf16.mxu0 0
    %175 = vmatpush1.bf16.msra.mxu0 0
    %176 = vmatprep.subr.bf16.mxu0 0
    %177 = vmatpush1.bf16.msra.mxu0 0
    %178 = vmatprep.mubr.bf16.mxu0 0
    %179 = vmatmul.mubr.bf16.gmra.mrb[0].mxu0 %v71
    %v180 = vpop.f32.mrb[0].mxu0
    %v181 = vadd.f32 %v96, %v180
    %v182 = vpop.f32.mrb[0].mxu0
    %v183 = vpop.f32.mrb[0].mxu0
    %v184 = vadd.f32 %v96, %v183
    %v185 = vpop.f32.mrb[0].mxu0
    %186 = vmatprep.mubr.bf16.mxu0 0
    %187 = vmatmul.mubr.bf16.gmra.mrb[0].mxu0 %v72
    %v188 = vpop.f32.mrb[0].mxu0
    %v189 = vadd.f32 %v96, %v188
    %v190 = vpop.f32.mrb[0].mxu0
    %v191 = vpop.f32.mrb[0].mxu0
    %v192 = vadd.f32 %v96, %v191
    %v193 = vpop.f32.mrb[0].mxu0
    %194 = vmatprep.mubr.bf16.mxu0 0
    %195 = vmatmul.mubr.bf16.gmra.mrb[0].mxu0 %v73
    %v196 = vpop.f32.mrb[0].mxu0
    %v197 = vadd.f32 %v96, %v196
    %v198 = vpop.f32.mrb[0].mxu0
    %v199 = vpop.f32.mrb[0].mxu0
    %v200 = vadd.f32 %v96, %v199
    %v201 = vpop.f32.mrb[0].mxu0
    %202 = vmatprep.mubr.bf16.mxu0 0
    %203 = vmatmul.mubr.bf16.gmra.mrb[0].mxu0 %v74
    %v204 = vpop.f32.mrb[0].mxu0
    %v205 = vadd.f32 %v96, %v204
    %v206 = vpop.f32.mrb[0].mxu0
    %v207 = vpop.f32.mrb[0].mxu0
    %v208 = vadd.f32 %v96, %v207
    %v209 = vpop.f32.mrb[0].mxu0
    %210 = vdwg.mxu0
    %v211 = vmax.f32 %v181, 0.0
    %v212 = vmax.f32 %v184, 0.0
    %v213 = vmax.f32 %v189, 0.0
    %v214 = vmax.f32 %v192, 0.0
    %v215 = vmax.f32 %v197, 0.0
    %v216 = vmax.f32 %v200, 0.0
    %v217 = vmax.f32 %v205, 0.0
    %v218 = vmax.f32 %v208, 0.0
    %v219 = vpack.c.bf16 %v212, %v211
    %v220 = vpack.c.bf16 %v214, %v213
    %v221 = vpack.c.bf16 %v216, %v215
    %v222 = vpack.c.bf16 %v218, %v217
    %v223 = vld [vmem:[#allocation7] sm:$0xf]
    %v224 = vld [vmem:[#allocation7 + $0x4] sm:$0xf]
    %v225 = vld [vmem:[#allocation7 + $0x8] sm:$0xf]
    %v226 = vld [vmem:[#allocation7 + $0xc] sm:$0xf]
    %v227 = vld [vmem:[#allocation7 + $0x10] sm:$0xf]
    %v228 = vld [vmem:[#allocation7 + $0x14] sm:$0xf]
    %v229 = vld [vmem:[#allocation7 + $0x18] sm:$0xf]
    %v230 = vld [vmem:[#allocation7 + $0x1c] sm:$0xf]
    %v231 = vld [vmem:[#allocation7 + $0x20] sm:$0xf]
    %v232 = vld [vmem:[#allocation7 + $0x24] sm:$0xf]
    %v233 = vld [vmem:[#allocation7 + $0x28] sm:$0xf]
    %v234 = vld [vmem:[#allocation7 + $0x2c] sm:$0xf]
    %v235 = vld [vmem:[#allocation7 + $0x30] sm:$0xf]
    %v236 = vld [vmem:[#allocation7 + $0x34] sm:$0xf]
    %v237 = vld [vmem:[#allocation7 + $0x38] sm:$0xf]
    %v238 = vld [vmem:[#allocation7 + $0x3c] sm:$0xf]
    %v239 = vld [vmem:[%s4] sm:$0x1]
    %v241 = vlaneseq
    %v242 = vshrl.u32 %v241, 7
    %v243 = vsub.s32 0, %v242
    %v244 = vrot.slane %v239, %v243
    %v262 = vunpack.c.l.b16 %v223
    %v263 = vunpack.c.l.b16 %v224
    %v264 = vunpack.c.l.b16 %v225
    %v265 = vunpack.c.l.b16 %v226
    %v266 = vunpack.c.l.b16 %v227
    %v267 = vunpack.c.l.b16 %v228
    %v268 = vunpack.c.l.b16 %v229
    %v269 = vunpack.c.l.b16 %v230
    %v270 = vunpack.c.l.b16 %v231
    %v271 = vunpack.c.l.b16 %v232
    %v272 = vunpack.c.l.b16 %v233
    %v273 = vunpack.c.l.b16 %v234
    %v274 = vunpack.c.l.b16 %v235
    %v275 = vunpack.c.l.b16 %v236
    %v276 = vunpack.c.l.b16 %v237
    %v277 = vunpack.c.l.b16 %v238
    %v278 = vpack.c.b16 %v263, %v262
    %v279 = vpack.c.b16 %v265, %v264
    %v280 = vpack.c.b16 %v267, %v266
    %v281 = vpack.c.b16 %v269, %v268
    %v282 = vpack.c.b16 %v271, %v270
    %v283 = vpack.c.b16 %v273, %v272
    %v284 = vpack.c.b16 %v275, %v274
    %v285 = vpack.c.b16 %v277, %v276
    %294 = vmatprep.subr.bf16.mxu0 0
    %295 = vmatpush1.bf16.msra.mxu0 %v278
    %296 = vmatprep.subr.bf16.mxu0 0
    %297 = vmatpush1.bf16.msra.mxu0 %v279
    %298 = vmatprep.subr.bf16.mxu0 0
    %299 = vmatpush1.bf16.msra.mxu0 %v280
    %300 = vmatprep.subr.bf16.mxu0 0
    %301 = vmatpush1.bf16.msra.mxu0 %v281
    %302 = vmatprep.subr.bf16.mxu0 0
    %303 = vmatpush1.bf16.msra.mxu0 %v282
    %304 = vmatprep.subr.bf16.mxu0 0
    %305 = vmatpush1.bf16.msra.mxu0 %v283
    %306 = vmatprep.subr.bf16.mxu0 0
    %307 = vmatpush1.bf16.msra.mxu0 %v284
    %308 = vmatprep.subr.bf16.mxu0 0
    %309 = vmatpush1.bf16.msra.mxu0 %v285
    %310 = vmatprep.subr.bf16.mxu0 0
    %311 = vmatpush1.bf16.msra.mxu0 0
    %312 = vmatprep.subr.bf16.mxu0 0
    %313 = vmatpush1.bf16.msra.mxu0 0
    %314 = vmatprep.subr.bf16.mxu0 0
    %315 = vmatpush1.bf16.msra.mxu0 0
    %316 = vmatprep.subr.bf16.mxu0 0
    %317 = vmatpush1.bf16.msra.mxu0 0
    %318 = vmatprep.subr.bf16.mxu0 0
    %319 = vmatpush1.bf16.msra.mxu0 0
    %320 = vmatprep.subr.bf16.mxu0 0
    %321 = vmatpush1.bf16.msra.mxu0 0
    %322 = vmatprep.subr.bf16.mxu0 0
    %323 = vmatpush1.bf16.msra.mxu0 0
    %324 = vmatprep.subr.bf16.mxu0 0
    %325 = vmatpush1.bf16.msra.mxu0 0
    %326 = vmatprep.mubr.bf16.mxu0 0
    %327 = vmatmul.mubr.bf16.gmra.mrb[0].mxu0 %v219
    %v328 = vpop.f32.mrb[0].mxu0
    %v329 = vadd.f32 %v244, %v328
    %v330 = vpop.f32.mrb[0].mxu0
    %v331 = vpop.f32.mrb[0].mxu0
    %v332 = vadd.f32 %v244, %v331
    %v333 = vpop.f32.mrb[0].mxu0
    %334 = vmatprep.mubr.bf16.mxu0 0
    %335 = vmatmul.mubr.bf16.gmra.mrb[0].mxu0 %v220
    %v336 = vpop.f32.mrb[0].mxu0
    %v337 = vadd.f32 %v244, %v336
    %v338 = vpop.f32.mrb[0].mxu0
    %v339 = vpop.f32.mrb[0].mxu0
    %v340 = vadd.f32 %v244, %v339
    %v341 = vpop.f32.mrb[0].mxu0
    %342 = vmatprep.mubr.bf16.mxu0 0
    %343 = vmatmul.mubr.bf16.gmra.mrb[0].mxu0 %v221
    %v344 = vpop.f32.mrb[0].mxu0
    %v345 = vadd.f32 %v244, %v344
    %v346 = vpop.f32.mrb[0].mxu0
    %v347 = vpop.f32.mrb[0].mxu0
    %v348 = vadd.f32 %v244, %v347
    %v349 = vpop.f32.mrb[0].mxu0
    %350 = vmatprep.mubr.bf16.mxu0 0
    %351 = vmatmul.mubr.bf16.gmra.mrb[0].mxu0 %v222
    %v352 = vpop.f32.mrb[0].mxu0
    %v353 = vadd.f32 %v244, %v352
    %v354 = vpop.f32.mrb[0].mxu0
    %v355 = vpop.f32.mrb[0].mxu0
    %v356 = vadd.f32 %v244, %v355
    %v357 = vpop.f32.mrb[0].mxu0
    %358 = vdwg.mxu0
    %359 = vst [vmem:[#allocation8] sm:$0xff] %v329
    %360 = vst [vmem:[#allocation8 + $0x8] sm:$0xff] %v332
    %361 = vst [vmem:[#allocation8 + $0x10] sm:$0xff] %v337
    %362 = vst [vmem:[#allocation8 + $0x18] sm:$0xff] %v340
    %363 = vst [vmem:[#allocation8 + $0x20] sm:$0xff] %v345
    %364 = vst [vmem:[#allocation8 + $0x28] sm:$0xff] %v348
    %365 = vst [vmem:[#allocation8 + $0x30] sm:$0xff] %v353
    %366 = vst [vmem:[#allocation8 + $0x38] sm:$0xff] %v356
    // Predicated region
    $region34: #{tpu_custom_call.1} parent=1 // pred_check
      _
    $region35: #{tpu_custom_call.1} parent=1 // pred_check_branch
      %368 = sbr.rel (0) target = $region37
    $region36: #{tpu_custom_call.1} parent=1 // pred_region
      %s370 = ssub.s32 1024, 1024
      %371 = vsyncadd [#allocation4], %s370
      %s372 = sshll.u32 [#allocation8], 4
      %s373 = int_to_ptr.vmem [resolvable:$true] %s372
      %378 = dma.vmem_to_hbm [thread:$0]  %s373, 1024, %s5, [#allocation4], 128, 128, 8
    $region37: #{tpu_custom_call.1} parent=1 // pred_fallthru
      _
    // Predicated region
    $region38: #{tpu_custom_call.1} parent=1 // pred_check
      _
    $region39: #{tpu_custom_call.1} parent=1 // pred_check_branch
      %380 = sbr.rel (0) target = $region41
    $region40: #{tpu_custom_call.1} parent=1 // pred_region
      %381 = dma.done [#allocation4], 1024
    $region41: #{tpu_custom_call.1} parent=1 // pred_fallthru
      _
    %382 = vsyncpa [#allocation3], 1
    %383 = vsyncpa [#allocation6], 1
    %384 = vsyncpa [#allocation4], 1

</llo_original>
